<compile_context>
chip_gen: v7x
topology: tpu7x:2x2x1
jax: 0.10.0
libtpu: 0.0.40
codegen_flags: <defaults>
</compile_context>

<pallas_src>
import jax
import jax.numpy as jnp
from jax.experimental import pallas as pl
from jax.experimental.pallas import tpu as pltpu


def _round_up(x, m):
    return (x + m - 1) // m * m


def state_lstm_kernel(x_ref, wih_ref, whh_ref, b_ref, wfc_ref, bfc_ref, out_ref):
    """Full LSTM recurrence + ReLU + FC + ReLU in one call.

    Refs (all whole-array VMEM; GP = lane-padded 4*H, OP = lane-padded output):
      x_ref   : (L, I)    f32  input sequence
      wih_ref : (I, GP)   f32  W_ih^T, packed gate columns [i | f | 2*g | o]
      whh_ref : (H, GP)   f32  W_hh^T, same packed column layout
      b_ref   : (1, GP)   f32  b_ih + b_hh, same layout (g block pre-scaled by 2)
      wfc_ref : (H, OP)   f32  fc_q1.weight^T, zero-padded output lanes
      bfc_ref : (1, OP)   f32  fc_q1.bias, zero-padded
      out_ref : (L, OP)   f32  lane-dense output (cropped to O outside)
    """
    L = x_ref.shape[0]
    H = whh_ref.shape[0]
    GP = whh_ref.shape[1]

    # Input-to-gate contribution for the whole sequence: one MXU matmul.
    xw = jnp.dot(x_ref[...], wih_ref[...],
                 preferred_element_type=jnp.float32) + b_ref[...]        # (L, GP)

    # Per-lane affine turning tanh(gates/2) into the gate activations:
    #   i/f/o lanes: sigmoid(z) = 0.5*tanh(z/2) + 0.5
    #   g lanes:     weights/bias pre-scaled by 2, so tanh(gates/2) = tanh(g)
    # Hoisted out of the loop (JAX does not CSE broadcast_in_dim).
    lane = jax.lax.broadcasted_iota(jnp.int32, (1, GP), 1)
    is_g = (lane >= 2 * H) & (lane < 3 * H)
    act_scale = jnp.where(is_g, 1.0, 0.5)
    act_off = jnp.where(is_g, 0.0, 0.5)

    # Hoist the recurrent weight into registers once (32x128 f32 = 4 vregs).
    whh = whh_ref[...]

    h = jnp.zeros((1, H), jnp.float32)
    c = jnp.zeros((1, H), jnp.float32)
    hs = []

    # Fully unrolled recurrence: L is small and static (guarded in wrapper).
    for t in range(L):
        gates = xw[t:t + 1, :] + jnp.dot(h, whh,
                                         preferred_element_type=jnp.float32)  # (1, GP)
        th = jnp.tanh(0.5 * gates)            # single EUP vreg-op for all gates
        act = th * act_scale + act_off        # [sig(i) | sig(f) | tanh(g) | sig(o)]
        i = act[:, 0 * H:1 * H]
        f = act[:, 1 * H:2 * H]
        g = act[:, 2 * H:3 * H]
        o = act[:, 3 * H:4 * H]
        c = f * c + i * g
        h = o * jnp.tanh(c)
        hs.append(h)                          # keep hidden rows as values

    h_all = jnp.concatenate(hs, axis=0)       # (L, H), one post-loop concat
    h_relu = jnp.maximum(h_all, 0.0)
    fc = jnp.dot(h_relu, wfc_ref[...],
                 preferred_element_type=jnp.float32) + bfc_ref[...]
    out_ref[...] = jnp.maximum(fc, 0.0)       # lane-dense (L, OP) store


def prepare_params(w_ih, w_hh, b_ih, b_hh, w_fc, b_fc):
    """One-time parameter packing (hoisted out of the per-call path).

    PyTorch shapes in: w_ih (4H, I), w_hh (4H, H), b_* (4H,), w_fc (O, H), b_fc (O,).
    Returns packed f32 operands for the kernel.
    """
    O, H = w_fc.shape
    G = 4 * H
    GP = _round_up(G, 128)
    OP = _round_up(O, 128)

    # Gate order in PyTorch is (i, f, g, o); pre-scale the g block by 2 (exact
    # in f32) so the kernel evaluates all four gates with one tanh(gates/2).
    gate_scale = jnp.concatenate([
        jnp.ones((H,), jnp.float32), jnp.ones((H,), jnp.float32),
        jnp.full((H,), 2.0, jnp.float32), jnp.ones((H,), jnp.float32)])

    def pack_gates(w):  # w: (4H, rows) -> (rows, GP), packed gate columns
        wt = (w * gate_scale[:, None]).T
        rows = wt.shape[0]
        return jnp.zeros((rows, GP), jnp.float32).at[:, :G].set(wt)

    wih_p = pack_gates(w_ih)                                            # (I, GP)
    whh_p = pack_gates(w_hh)                                            # (H, GP)
    b_p = jnp.zeros((1, GP), jnp.float32).at[0, :G].set(
        (b_ih + b_hh) * gate_scale)                                     # (1, GP)
    wfc_p = jnp.zeros((H, OP), jnp.float32).at[:, :O].set(w_fc.T)       # (H, OP)
    bfc_p = jnp.zeros((1, OP), jnp.float32).at[0, :O].set(b_fc)         # (1, OP)
    return wih_p, whh_p, b_p, wfc_p, bfc_p


def state_lstm_forward(x, packed_params, output_size):
    """x: (L, I) f32; packed_params from prepare_params(). Returns (L, O) f32."""
    wih_p, whh_p, b_p, wfc_p, bfc_p = packed_params
    L, I = x.shape
    H = whh_p.shape[0]
    GP = whh_p.shape[1]
    OP = wfc_p.shape[1]

    # Guard the full unroll; for long sequences use a bounded-unroll fori_loop.
    assert L <= 64, "unrolled recurrence intended for short static sequences"

    flops = 2 * L * I * GP + 2 * L * H * GP + 2 * L * H * OP
    transcendentals = L * (GP + H)
    bytes_accessed = 4 * (x.size + wih_p.size + whh_p.size + b_p.size +
                          wfc_p.size + bfc_p.size + L * OP)

    out_p = pl.pallas_call(
        state_lstm_kernel,
        out_shape=jax.ShapeDtypeStruct((L, OP), jnp.float32),
        in_specs=[pl.BlockSpec(memory_space=pltpu.MemorySpace.VMEM)] * 6,
        out_specs=pl.BlockSpec(memory_space=pltpu.MemorySpace.VMEM),
        compiler_params=pltpu.CompilerParams(vmem_limit_bytes=4 * 1024 * 1024),
        cost_estimate=pl.CostEstimate(flops=flops,
                                      transcendentals=transcendentals,
                                      bytes_accessed=bytes_accessed),
    )(x, wih_p, whh_p, b_p, wfc_p, bfc_p)
    return out_p[:, :output_size]


def reference_forward(x, w_ih, w_hh, b_ih, b_hh, w_fc, b_fc):
    """Pure-JAX f32 reference with PyTorch nn.LSTM gate semantics."""
    H = w_hh.shape[1]
    xw = x @ w_ih.T + (b_ih + b_hh)[None, :]                            # (L, 4H)

    def step(carry, gx):
        h, c = carry
        gates = gx[None, :] + h @ w_hh.T
        i = jax.nn.sigmoid(gates[:, 0 * H:1 * H])
        f = jax.nn.sigmoid(gates[:, 1 * H:2 * H])
        g = jnp.tanh(gates[:, 2 * H:3 * H])
        o = jax.nn.sigmoid(gates[:, 3 * H:4 * H])
        c_new = f * c + i * g
        h_new = o * jnp.tanh(c_new)
        return (h_new, c_new), h_new[0]

    h0 = jnp.zeros((1, H), jnp.float32)
    c0 = jnp.zeros((1, H), jnp.float32)
    _, hs = jax.lax.scan(step, (h0, c0), xw)
    out = jnp.maximum(hs, 0.0)
    return jnp.maximum(out @ w_fc.T + b_fc[None, :], 0.0)


if __name__ == "__main__":
    # Small, deterministic shapes: seq=8, input=16, hidden=32, output=8.
    seq_len, input_size, hidden_size, output_size = 8, 16, 32, 8

    key = jax.random.PRNGKey(0)
    k = jax.random.split(key, 7)
    bound = float(hidden_size) ** -0.5

    # PyTorch-style parameter shapes.
    w_ih = jax.random.uniform(k[0], (4 * hidden_size, input_size), jnp.float32, -bound, bound)
    w_hh = jax.random.uniform(k[1], (4 * hidden_size, hidden_size), jnp.float32, -bound, bound)
    b_ih = jax.random.uniform(k[2], (4 * hidden_size,), jnp.float32, -bound, bound)
    b_hh = jax.random.uniform(k[3], (4 * hidden_size,), jnp.float32, -bound, bound)
    w_fc = jax.random.uniform(k[4], (output_size, hidden_size), jnp.float32, -bound, bound)
    b_fc = jax.random.uniform(k[5], (output_size,), jnp.float32, -bound, bound)

    x = jax.random.normal(k[6], (seq_len, input_size), jnp.float32)

    # Parameter packing done ONCE; the jitted forward only runs the kernel.
    packed = prepare_params(w_ih, w_hh, b_ih, b_hh, w_fc, b_fc)
    fwd = jax.jit(state_lstm_forward, static_argnums=(2,))

    out = jax.block_until_ready(fwd(x, packed, output_size))
    assert out.shape == (seq_len, output_size)

    ref = reference_forward(x, w_ih, w_hh, b_ih, b_hh, w_fc, b_fc)
    assert jnp.allclose(out, ref, rtol=1e-4, atol=1e-4), "mismatch vs reference"

    print("KERNEL_OK")
</pallas_src>

<mosaic_0001>
module attributes {stable_mosaic.version = 11 : i64} {
  func.func @state_lstm_kernel(%arg0: memref<8x16xf32, #tpu.memory_space<vmem>>, %arg1: memref<16x128xf32, #tpu.memory_space<vmem>>, %arg2: memref<32x128xf32, #tpu.memory_space<vmem>>, %arg3: memref<1x128xf32, #tpu.memory_space<vmem>>, %arg4: memref<32x128xf32, #tpu.memory_space<vmem>>, %arg5: memref<1x128xf32, #tpu.memory_space<vmem>>, %arg6: memref<8x128xf32, #tpu.memory_space<vmem>>) attributes {dimension_semantics = [], scalar_prefetch = 0 : i64, scratch_operands = 0 : i64, tpu.core_type = #tpu.core_type<tc>} {
    %c0 = arith.constant 0 : index
    %c0_0 = arith.constant 0 : index
    %0 = vector.load %arg0[%c0, %c0_0] : memref<8x16xf32, #tpu.memory_space<vmem>>, vector<8x16xf32>
    %c0_1 = arith.constant 0 : index
    %c0_2 = arith.constant 0 : index
    %1 = vector.load %arg1[%c0_1, %c0_2] : memref<16x128xf32, #tpu.memory_space<vmem>>, vector<16x128xf32>
    %cst = arith.constant dense<0.000000e+00> : vector<8x128xf32>
    %2 = tpu.matmul %0, %1, %cst {dimension_numbers = #tpu.dot_dimension_numbers<[1], [0], [0], [1], [0, 0, 1, 1], [], []>} : vector<8x16xf32>, vector<16x128xf32>, vector<8x128xf32> -> vector<8x128xf32>
    %c0_3 = arith.constant 0 : index
    %c0_4 = arith.constant 0 : index
    %3 = vector.load %arg3[%c0_3, %c0_4] : memref<1x128xf32, #tpu.memory_space<vmem>>, vector<1x128xf32>
    %4 = vector.broadcast %3 : vector<1x128xf32> to vector<8x128xf32>
    %5 = arith.addf %2, %4 : vector<8x128xf32>
    %6 = tpu.iota {dimensions = array<i32: 1>} : vector<1x128xi32>
    %c64_i32 = arith.constant 64 : i32
    %7 = vector.broadcast %c64_i32 : i32 to vector<1x128xi32>
    %8 = arith.cmpi sge, %6, %7 : vector<1x128xi32>
    %c96_i32 = arith.constant 96 : i32
    %9 = vector.broadcast %c96_i32 : i32 to vector<1x128xi32>
    %10 = arith.cmpi slt, %6, %9 : vector<1x128xi32>
    %11 = arith.andi %8, %10 : vector<1x128xi1>
    %cst_5 = arith.constant 1.000000e+00 : f32
    %cst_6 = arith.constant 5.000000e-01 : f32
    %12 = vector.broadcast %cst_5 : f32 to vector<1x128xf32>
    %13 = vector.broadcast %cst_6 : f32 to vector<1x128xf32>
    %14 = arith.select %11, %12, %13 : vector<1x128xi1>, vector<1x128xf32>
    %cst_7 = arith.constant 0.000000e+00 : f32
    %cst_8 = arith.constant 5.000000e-01 : f32
    %15 = vector.broadcast %cst_7 : f32 to vector<1x128xf32>
    %16 = vector.broadcast %cst_8 : f32 to vector<1x128xf32>
    %17 = arith.select %11, %15, %16 : vector<1x128xi1>, vector<1x128xf32>
    %c0_9 = arith.constant 0 : index
    %c0_10 = arith.constant 0 : index
    %18 = vector.load %arg2[%c0_9, %c0_10] : memref<32x128xf32, #tpu.memory_space<vmem>>, vector<32x128xf32>
    %cst_11 = arith.constant 0.000000e+00 : f32
    %19 = vector.broadcast %cst_11 : f32 to vector<1x32xf32>
    %cst_12 = arith.constant 0.000000e+00 : f32
    %20 = vector.broadcast %cst_12 : f32 to vector<1x32xf32>
    %21 = vector.extract_strided_slice %5 {offsets = [0, 0], sizes = [1, 128], strides = [1, 1]} : vector<8x128xf32> to vector<1x128xf32>
    %cst_13 = arith.constant dense<0.000000e+00> : vector<1x128xf32>
    %22 = tpu.matmul %19, %18, %cst_13 {dimension_numbers = #tpu.dot_dimension_numbers<[1], [0], [0], [1], [0, 0, 1, 1], [], []>} : vector<1x32xf32>, vector<32x128xf32>, vector<1x128xf32> -> vector<1x128xf32>
    %23 = arith.addf %21, %22 : vector<1x128xf32>
    %cst_14 = arith.constant 5.000000e-01 : f32
    %24 = vector.broadcast %cst_14 : f32 to vector<1x128xf32>
    %25 = arith.mulf %24, %23 : vector<1x128xf32>
    %26 = math.tanh %25 : vector<1x128xf32>
    %27 = arith.mulf %26, %14 : vector<1x128xf32>
    %28 = arith.addf %27, %17 : vector<1x128xf32>
    %29 = vector.extract_strided_slice %28 {offsets = [0, 0], sizes = [1, 32], strides = [1, 1]} : vector<1x128xf32> to vector<1x32xf32>
    %30 = vector.extract_strided_slice %28 {offsets = [0, 32], sizes = [1, 32], strides = [1, 1]} : vector<1x128xf32> to vector<1x32xf32>
    %31 = vector.extract_strided_slice %28 {offsets = [0, 64], sizes = [1, 32], strides = [1, 1]} : vector<1x128xf32> to vector<1x32xf32>
    %32 = vector.extract_strided_slice %28 {offsets = [0, 96], sizes = [1, 32], strides = [1, 1]} : vector<1x128xf32> to vector<1x32xf32>
    %33 = arith.mulf %30, %20 : vector<1x32xf32>
    %34 = arith.mulf %29, %31 : vector<1x32xf32>
    %35 = arith.addf %33, %34 : vector<1x32xf32>
    %36 = math.tanh %35 : vector<1x32xf32>
    %37 = arith.mulf %32, %36 : vector<1x32xf32>
    %38 = vector.extract_strided_slice %5 {offsets = [1, 0], sizes = [1, 128], strides = [1, 1]} : vector<8x128xf32> to vector<1x128xf32>
    %cst_15 = arith.constant dense<0.000000e+00> : vector<1x128xf32>
    %39 = tpu.matmul %37, %18, %cst_15 {dimension_numbers = #tpu.dot_dimension_numbers<[1], [0], [0], [1], [0, 0, 1, 1], [], []>} : vector<1x32xf32>, vector<32x128xf32>, vector<1x128xf32> -> vector<1x128xf32>
    %40 = arith.addf %38, %39 : vector<1x128xf32>
    %cst_16 = arith.constant 5.000000e-01 : f32
    %41 = vector.broadcast %cst_16 : f32 to vector<1x128xf32>
    %42 = arith.mulf %41, %40 : vector<1x128xf32>
    %43 = math.tanh %42 : vector<1x128xf32>
    %44 = arith.mulf %43, %14 : vector<1x128xf32>
    %45 = arith.addf %44, %17 : vector<1x128xf32>
    %46 = vector.extract_strided_slice %45 {offsets = [0, 0], sizes = [1, 32], strides = [1, 1]} : vector<1x128xf32> to vector<1x32xf32>
    %47 = vector.extract_strided_slice %45 {offsets = [0, 32], sizes = [1, 32], strides = [1, 1]} : vector<1x128xf32> to vector<1x32xf32>
    %48 = vector.extract_strided_slice %45 {offsets = [0, 64], sizes = [1, 32], strides = [1, 1]} : vector<1x128xf32> to vector<1x32xf32>
    %49 = vector.extract_strided_slice %45 {offsets = [0, 96], sizes = [1, 32], strides = [1, 1]} : vector<1x128xf32> to vector<1x32xf32>
    %50 = arith.mulf %47, %35 : vector<1x32xf32>
    %51 = arith.mulf %46, %48 : vector<1x32xf32>
    %52 = arith.addf %50, %51 : vector<1x32xf32>
    %53 = math.tanh %52 : vector<1x32xf32>
    %54 = arith.mulf %49, %53 : vector<1x32xf32>
    %55 = vector.extract_strided_slice %5 {offsets = [2, 0], sizes = [1, 128], strides = [1, 1]} : vector<8x128xf32> to vector<1x128xf32>
    %cst_17 = arith.constant dense<0.000000e+00> : vector<1x128xf32>
    %56 = tpu.matmul %54, %18, %cst_17 {dimension_numbers = #tpu.dot_dimension_numbers<[1], [0], [0], [1], [0, 0, 1, 1], [], []>} : vector<1x32xf32>, vector<32x128xf32>, vector<1x128xf32> -> vector<1x128xf32>
    %57 = arith.addf %55, %56 : vector<1x128xf32>
    %cst_18 = arith.constant 5.000000e-01 : f32
    %58 = vector.broadcast %cst_18 : f32 to vector<1x128xf32>
    %59 = arith.mulf %58, %57 : vector<1x128xf32>
    %60 = math.tanh %59 : vector<1x128xf32>
    %61 = arith.mulf %60, %14 : vector<1x128xf32>
    %62 = arith.addf %61, %17 : vector<1x128xf32>
    %63 = vector.extract_strided_slice %62 {offsets = [0, 0], sizes = [1, 32], strides = [1, 1]} : vector<1x128xf32> to vector<1x32xf32>
    %64 = vector.extract_strided_slice %62 {offsets = [0, 32], sizes = [1, 32], strides = [1, 1]} : vector<1x128xf32> to vector<1x32xf32>
    %65 = vector.extract_strided_slice %62 {offsets = [0, 64], sizes = [1, 32], strides = [1, 1]} : vector<1x128xf32> to vector<1x32xf32>
    %66 = vector.extract_strided_slice %62 {offsets = [0, 96], sizes = [1, 32], strides = [1, 1]} : vector<1x128xf32> to vector<1x32xf32>
    %67 = arith.mulf %64, %52 : vector<1x32xf32>
    %68 = arith.mulf %63, %65 : vector<1x32xf32>
    %69 = arith.addf %67, %68 : vector<1x32xf32>
    %70 = math.tanh %69 : vector<1x32xf32>
    %71 = arith.mulf %66, %70 : vector<1x32xf32>
    %72 = vector.extract_strided_slice %5 {offsets = [3, 0], sizes = [1, 128], strides = [1, 1]} : vector<8x128xf32> to vector<1x128xf32>
    %cst_19 = arith.constant dense<0.000000e+00> : vector<1x128xf32>
    %73 = tpu.matmul %71, %18, %cst_19 {dimension_numbers = #tpu.dot_dimension_numbers<[1], [0], [0], [1], [0, 0, 1, 1], [], []>} : vector<1x32xf32>, vector<32x128xf32>, vector<1x128xf32> -> vector<1x128xf32>
    %74 = arith.addf %72, %73 : vector<1x128xf32>
    %cst_20 = arith.constant 5.000000e-01 : f32
    %75 = vector.broadcast %cst_20 : f32 to vector<1x128xf32>
    %76 = arith.mulf %75, %74 : vector<1x128xf32>
    %77 = math.tanh %76 : vector<1x128xf32>
    %78 = arith.mulf %77, %14 : vector<1x128xf32>
    %79 = arith.addf %78, %17 : vector<1x128xf32>
    %80 = vector.extract_strided_slice %79 {offsets = [0, 0], sizes = [1, 32], strides = [1, 1]} : vector<1x128xf32> to vector<1x32xf32>
    %81 = vector.extract_strided_slice %79 {offsets = [0, 32], sizes = [1, 32], strides = [1, 1]} : vector<1x128xf32> to vector<1x32xf32>
    %82 = vector.extract_strided_slice %79 {offsets = [0, 64], sizes = [1, 32], strides = [1, 1]} : vector<1x128xf32> to vector<1x32xf32>
    %83 = vector.extract_strided_slice %79 {offsets = [0, 96], sizes = [1, 32], strides = [1, 1]} : vector<1x128xf32> to vector<1x32xf32>
    %84 = arith.mulf %81, %69 : vector<1x32xf32>
    %85 = arith.mulf %80, %82 : vector<1x32xf32>
    %86 = arith.addf %84, %85 : vector<1x32xf32>
    %87 = math.tanh %86 : vector<1x32xf32>
    %88 = arith.mulf %83, %87 : vector<1x32xf32>
    %89 = vector.extract_strided_slice %5 {offsets = [4, 0], sizes = [1, 128], strides = [1, 1]} : vector<8x128xf32> to vector<1x128xf32>
    %cst_21 = arith.constant dense<0.000000e+00> : vector<1x128xf32>
    %90 = tpu.matmul %88, %18, %cst_21 {dimension_numbers = #tpu.dot_dimension_numbers<[1], [0], [0], [1], [0, 0, 1, 1], [], []>} : vector<1x32xf32>, vector<32x128xf32>, vector<1x128xf32> -> vector<1x128xf32>
    %91 = arith.addf %89, %90 : vector<1x128xf32>
    %cst_22 = arith.constant 5.000000e-01 : f32
    %92 = vector.broadcast %cst_22 : f32 to vector<1x128xf32>
    %93 = arith.mulf %92, %91 : vector<1x128xf32>
    %94 = math.tanh %93 : vector<1x128xf32>
    %95 = arith.mulf %94, %14 : vector<1x128xf32>
    %96 = arith.addf %95, %17 : vector<1x128xf32>
    %97 = vector.extract_strided_slice %96 {offsets = [0, 0], sizes = [1, 32], strides = [1, 1]} : vector<1x128xf32> to vector<1x32xf32>
    %98 = vector.extract_strided_slice %96 {offsets = [0, 32], sizes = [1, 32], strides = [1, 1]} : vector<1x128xf32> to vector<1x32xf32>
    %99 = vector.extract_strided_slice %96 {offsets = [0, 64], sizes = [1, 32], strides = [1, 1]} : vector<1x128xf32> to vector<1x32xf32>
    %100 = vector.extract_strided_slice %96 {offsets = [0, 96], sizes = [1, 32], strides = [1, 1]} : vector<1x128xf32> to vector<1x32xf32>
    %101 = arith.mulf %98, %86 : vector<1x32xf32>
    %102 = arith.mulf %97, %99 : vector<1x32xf32>
    %103 = arith.addf %101, %102 : vector<1x32xf32>
    %104 = math.tanh %103 : vector<1x32xf32>
    %105 = arith.mulf %100, %104 : vector<1x32xf32>
    %106 = vector.extract_strided_slice %5 {offsets = [5, 0], sizes = [1, 128], strides = [1, 1]} : vector<8x128xf32> to vector<1x128xf32>
    %cst_23 = arith.constant dense<0.000000e+00> : vector<1x128xf32>
    %107 = tpu.matmul %105, %18, %cst_23 {dimension_numbers = #tpu.dot_dimension_numbers<[1], [0], [0], [1], [0, 0, 1, 1], [], []>} : vector<1x32xf32>, vector<32x128xf32>, vector<1x128xf32> -> vector<1x128xf32>
    %108 = arith.addf %106, %107 : vector<1x128xf32>
    %cst_24 = arith.constant 5.000000e-01 : f32
    %109 = vector.broadcast %cst_24 : f32 to vector<1x128xf32>
    %110 = arith.mulf %109, %108 : vector<1x128xf32>
    %111 = math.tanh %110 : vector<1x128xf32>
    %112 = arith.mulf %111, %14 : vector<1x128xf32>
    %113 = arith.addf %112, %17 : vector<1x128xf32>
    %114 = vector.extract_strided_slice %113 {offsets = [0, 0], sizes = [1, 32], strides = [1, 1]} : vector<1x128xf32> to vector<1x32xf32>
    %115 = vector.extract_strided_slice %113 {offsets = [0, 32], sizes = [1, 32], strides = [1, 1]} : vector<1x128xf32> to vector<1x32xf32>
    %116 = vector.extract_strided_slice %113 {offsets = [0, 64], sizes = [1, 32], strides = [1, 1]} : vector<1x128xf32> to vector<1x32xf32>
    %117 = vector.extract_strided_slice %113 {offsets = [0, 96], sizes = [1, 32], strides = [1, 1]} : vector<1x128xf32> to vector<1x32xf32>
    %118 = arith.mulf %115, %103 : vector<1x32xf32>
    %119 = arith.mulf %114, %116 : vector<1x32xf32>
    %120 = arith.addf %118, %119 : vector<1x32xf32>
    %121 = math.tanh %120 : vector<1x32xf32>
    %122 = arith.mulf %117, %121 : vector<1x32xf32>
    %123 = vector.extract_strided_slice %5 {offsets = [6, 0], sizes = [1, 128], strides = [1, 1]} : vector<8x128xf32> to vector<1x128xf32>
    %cst_25 = arith.constant dense<0.000000e+00> : vector<1x128xf32>
    %124 = tpu.matmul %122, %18, %cst_25 {dimension_numbers = #tpu.dot_dimension_numbers<[1], [0], [0], [1], [0, 0, 1, 1], [], []>} : vector<1x32xf32>, vector<32x128xf32>, vector<1x128xf32> -> vector<1x128xf32>
    %125 = arith.addf %123, %124 : vector<1x128xf32>
    %cst_26 = arith.constant 5.000000e-01 : f32
    %126 = vector.broadcast %cst_26 : f32 to vector<1x128xf32>
    %127 = arith.mulf %126, %125 : vector<1x128xf32>
    %128 = math.tanh %127 : vector<1x128xf32>
    %129 = arith.mulf %128, %14 : vector<1x128xf32>
    %130 = arith.addf %129, %17 : vector<1x128xf32>
    %131 = vector.extract_strided_slice %130 {offsets = [0, 0], sizes = [1, 32], strides = [1, 1]} : vector<1x128xf32> to vector<1x32xf32>
    %132 = vector.extract_strided_slice %130 {offsets = [0, 32], sizes = [1, 32], strides = [1, 1]} : vector<1x128xf32> to vector<1x32xf32>
    %133 = vector.extract_strided_slice %130 {offsets = [0, 64], sizes = [1, 32], strides = [1, 1]} : vector<1x128xf32> to vector<1x32xf32>
    %134 = vector.extract_strided_slice %130 {offsets = [0, 96], sizes = [1, 32], strides = [1, 1]} : vector<1x128xf32> to vector<1x32xf32>
    %135 = arith.mulf %132, %120 : vector<1x32xf32>
    %136 = arith.mulf %131, %133 : vector<1x32xf32>
    %137 = arith.addf %135, %136 : vector<1x32xf32>
    %138 = math.tanh %137 : vector<1x32xf32>
    %139 = arith.mulf %134, %138 : vector<1x32xf32>
    %140 = vector.extract_strided_slice %5 {offsets = [7, 0], sizes = [1, 128], strides = [1, 1]} : vector<8x128xf32> to vector<1x128xf32>
    %cst_27 = arith.constant dense<0.000000e+00> : vector<1x128xf32>
    %141 = tpu.matmul %139, %18, %cst_27 {dimension_numbers = #tpu.dot_dimension_numbers<[1], [0], [0], [1], [0, 0, 1, 1], [], []>} : vector<1x32xf32>, vector<32x128xf32>, vector<1x128xf32> -> vector<1x128xf32>
    %142 = arith.addf %140, %141 : vector<1x128xf32>
    %cst_28 = arith.constant 5.000000e-01 : f32
    %143 = vector.broadcast %cst_28 : f32 to vector<1x128xf32>
    %144 = arith.mulf %143, %142 : vector<1x128xf32>
    %145 = math.tanh %144 : vector<1x128xf32>
    %146 = arith.mulf %145, %14 : vector<1x128xf32>
    %147 = arith.addf %146, %17 : vector<1x128xf32>
    %148 = vector.extract_strided_slice %147 {offsets = [0, 0], sizes = [1, 32], strides = [1, 1]} : vector<1x128xf32> to vector<1x32xf32>
    %149 = vector.extract_strided_slice %147 {offsets = [0, 32], sizes = [1, 32], strides = [1, 1]} : vector<1x128xf32> to vector<1x32xf32>
    %150 = vector.extract_strided_slice %147 {offsets = [0, 64], sizes = [1, 32], strides = [1, 1]} : vector<1x128xf32> to vector<1x32xf32>
    %151 = vector.extract_strided_slice %147 {offsets = [0, 96], sizes = [1, 32], strides = [1, 1]} : vector<1x128xf32> to vector<1x32xf32>
    %152 = arith.mulf %149, %137 : vector<1x32xf32>
    %153 = arith.mulf %148, %150 : vector<1x32xf32>
    %154 = arith.addf %152, %153 : vector<1x32xf32>
    %155 = math.tanh %154 : vector<1x32xf32>
    %156 = arith.mulf %151, %155 : vector<1x32xf32>
    %157 = tpu.concatenate %37, %54, %71, %88, %105, %122, %139, %156 in 0 : vector<1x32xf32>, vector<1x32xf32>, vector<1x32xf32>, vector<1x32xf32>, vector<1x32xf32>, vector<1x32xf32>, vector<1x32xf32>, vector<1x32xf32> -> vector<8x32xf32>
    %cst_29 = arith.constant 0.000000e+00 : f32
    %158 = vector.broadcast %cst_29 : f32 to vector<8x32xf32>
    %159 = arith.maximumf %157, %158 : vector<8x32xf32>
    %c0_30 = arith.constant 0 : index
    %c0_31 = arith.constant 0 : index
    %160 = vector.load %arg4[%c0_30, %c0_31] : memref<32x128xf32, #tpu.memory_space<vmem>>, vector<32x128xf32>
    %cst_32 = arith.constant dense<0.000000e+00> : vector<8x128xf32>
    %161 = tpu.matmul %159, %160, %cst_32 {dimension_numbers = #tpu.dot_dimension_numbers<[1], [0], [0], [1], [0, 0, 1, 1], [], []>} : vector<8x32xf32>, vector<32x128xf32>, vector<8x128xf32> -> vector<8x128xf32>
    %c0_33 = arith.constant 0 : index
    %c0_34 = arith.constant 0 : index
    %162 = vector.load %arg5[%c0_33, %c0_34] : memref<1x128xf32, #tpu.memory_space<vmem>>, vector<1x128xf32>
    %163 = vector.broadcast %162 : vector<1x128xf32> to vector<8x128xf32>
    %164 = arith.addf %161, %163 : vector<8x128xf32>
    %cst_35 = arith.constant 0.000000e+00 : f32
    %165 = vector.broadcast %cst_35 : f32 to vector<8x128xf32>
    %166 = arith.maximumf %164, %165 : vector<8x128xf32>
    %c0_36 = arith.constant 0 : index
    %c0_37 = arith.constant 0 : index
    %167 = vector.load %arg6[%c0_36, %c0_37] : memref<8x128xf32, #tpu.memory_space<vmem>>, vector<8x128xf32>
    tpu.vector_store %arg6[%c0_36, %c0_37], %166 {strides = array<i32>} : memref<8x128xf32, #tpu.memory_space<vmem>>, vector<8x128xf32>,
    return
  }
}

</mosaic_0001>

<llo_original>
// kernel: state_lstm_forward.1
$region0: #{state_lstm_forward.1}
  #allocation0 [shape = 'u32[]', space=smem, size = 0x4, offset = 0x4, fixed_abs, tag = 'smem constant byte address 0x4 - core index']
  #allocation1 [shape = 'u32[144,128]{1,0:T(1,128)}', space=vmem, size = 0x12000, scoped, tag = 'internal scratch']
  %s0 = inlined_call_operand.hbm [shape: f32[8,16], index: 0, kind: input, shape index: {}]
  %s1 = inlined_call_operand.hbm [shape: f32[16,128], index: 1, kind: input, shape index: {}]
  %s2 = inlined_call_operand.hbm [shape: f32[32,128], index: 2, kind: input, shape index: {}]
  %s3 = inlined_call_operand.vmem [shape: f32[1,128], index: 3, kind: input, shape index: {}]
  %s4 = inlined_call_operand.hbm [shape: f32[32,128], index: 4, kind: input, shape index: {}]
  %s5 = inlined_call_operand.vmem [shape: f32[1,128], index: 5, kind: input, shape index: {}]
  %s6 = inlined_call_operand.hbm [shape: f32[8,128], index: 6, kind: output, shape index: {}]
  %s7 = sld [smem:[#allocation0]]
  $region50: #{state_lstm_forward.1} parent=0
    _
  %s9 = ssub.s32 1, %s7
  %s10 = scalar_select 0, %s9, %s7
  $region1: #{state_lstm_forward.1} parent=0
    #allocation2 [shape = 'u8[4096]{0}', space=vmem, size = 0x1000, scoped, tag = 'input window, operand 0, single buffered']
    #allocation3 [shape = 's32[1]{0}', space=sflag, size = 0x4, scoped, tag = 'scoped memory for state_lstm_forward.1']
    #allocation4 [shape = 's32[1]{0}', space=sflag, size = 0x4, scoped, tag = 'scoped memory for state_lstm_forward.1']
    #allocation5 [shape = 'u8[8192]{0}', space=vmem, size = 0x2000, scoped, tag = 'input window, operand 1, single buffered']
    #allocation6 [shape = 's32[1]{0}', space=sflag, size = 0x4, scoped, tag = 'scoped memory for state_lstm_forward.1']
    #allocation7 [shape = 'u8[16384]{0}', space=vmem, size = 0x4000, scoped, tag = 'input window, operand 2, single buffered']
    #allocation8 [shape = 'u8[16384]{0}', space=vmem, size = 0x4000, scoped, tag = 'input window, operand 4, single buffered']
    #allocation9 [shape = 's32[1]{0}', space=sflag, size = 0x4, scoped, tag = 'scoped memory for state_lstm_forward.1']
    #allocation10 [shape = 'u8[4096]{0}', space=vmem, size = 0x1000, scoped, tag = 'output window, operand 0, single buffered']
    %11 = vsyncpa [#allocation3], 0
    %12 = vsyncpa [#allocation6], 0
    %13 = vsyncpa [#allocation9], 0
    %14 = vsyncpa [#allocation4], 0
    // Predicated region
    $region2: #{state_lstm_forward.1} parent=1 // pred_check
      _
    $region3: #{state_lstm_forward.1} parent=1 // pred_check_branch
      %16 = sbr.rel (0) target = $region5
    $region4: #{state_lstm_forward.1} parent=1 // pred_region
      %s18 = ssub.s32 128, 128
      %19 = vsyncadd [#allocation3], %s18
      %s21 = sshll.u32 [#allocation2], 4
      %s22 = int_to_ptr.vmem [resolvable:$true] %s21
      %24 = dma.hbm_to_vmem [thread:$0]  %s0, 128, %s22, [#allocation3]
    $region5: #{state_lstm_forward.1} parent=1 // pred_fallthru
      _
    // Predicated region
    $region6: #{state_lstm_forward.1} parent=1 // pred_check
      _
    $region7: #{state_lstm_forward.1} parent=1 // pred_check_branch
      %26 = sbr.rel (0) target = $region9
    $region8: #{state_lstm_forward.1} parent=1 // pred_region
      %s28 = ssub.s32 256, 256
      %29 = vsyncadd [#allocation6], %s28
      %s30 = sshll.u32 [#allocation5], 4
      %s31 = int_to_ptr.vmem [resolvable:$true] %s30
      %36 = dma.hbm_to_vmem [thread:$0]  %s1, 256, %s31, [#allocation6], 128, 128, 8
    $region9: #{state_lstm_forward.1} parent=1 // pred_fallthru
      _
    // Predicated region
    $region10: #{state_lstm_forward.1} parent=1 // pred_check
      _
    $region11: #{state_lstm_forward.1} parent=1 // pred_check_branch
      %38 = sbr.rel (0) target = $region13
    $region12: #{state_lstm_forward.1} parent=1 // pred_region
      %s40 = ssub.s32 512, 512
      %41 = vsyncadd [#allocation6], %s40
      %s42 = sshll.u32 [#allocation7], 4
      %s43 = int_to_ptr.vmem [resolvable:$true] %s42
      %48 = dma.hbm_to_vmem [thread:$0]  %s2, 512, %s43, [#allocation6], 128, 128, 8
    $region13: #{state_lstm_forward.1} parent=1 // pred_fallthru
      _
    // Predicated region
    $region14: #{state_lstm_forward.1} parent=1 // pred_check
      _
    $region15: #{state_lstm_forward.1} parent=1 // pred_check_branch
      %50 = sbr.rel (0) target = $region17
    $region16: #{state_lstm_forward.1} parent=1 // pred_region
      _
    $region17: #{state_lstm_forward.1} parent=1 // pred_fallthru
      _
    // Predicated region
    $region18: #{state_lstm_forward.1} parent=1 // pred_check
      _
    $region19: #{state_lstm_forward.1} parent=1 // pred_check_branch
      %52 = sbr.rel (0) target = $region21
    $region20: #{state_lstm_forward.1} parent=1 // pred_region
      %s54 = ssub.s32 512, 512
      %55 = vsyncadd [#allocation9], %s54
      %s56 = sshll.u32 [#allocation8], 4
      %s57 = int_to_ptr.vmem [resolvable:$true] %s56
      %62 = dma.hbm_to_vmem [thread:$0]  %s4, 512, %s57, [#allocation9], 128, 128, 8
    $region21: #{state_lstm_forward.1} parent=1 // pred_fallthru
      _
    // Predicated region
    $region22: #{state_lstm_forward.1} parent=1 // pred_check
      _
    $region23: #{state_lstm_forward.1} parent=1 // pred_check_branch
      %64 = sbr.rel (0) target = $region25
    $region24: #{state_lstm_forward.1} parent=1 // pred_region
      _
    $region25: #{state_lstm_forward.1} parent=1 // pred_fallthru
      _
    // Predicated region
    $region26: #{state_lstm_forward.1} parent=1 // pred_check
      _
    $region27: #{state_lstm_forward.1} parent=1 // pred_check_branch
      %66 = sbr.rel (0) target = $region29
    $region28: #{state_lstm_forward.1} parent=1 // pred_region
      %67 = dma.done [#allocation3], 128
    $region29: #{state_lstm_forward.1} parent=1 // pred_fallthru
      _
    // Predicated region
    $region30: #{state_lstm_forward.1} parent=1 // pred_check
      _
    $region31: #{state_lstm_forward.1} parent=1 // pred_check_branch
      %69 = sbr.rel (0) target = $region33
    $region32: #{state_lstm_forward.1} parent=1 // pred_region
      %70 = dma.done [#allocation6], 256
    $region33: #{state_lstm_forward.1} parent=1 // pred_fallthru
      _
    // Predicated region
    $region34: #{state_lstm_forward.1} parent=1 // pred_check
      _
    $region35: #{state_lstm_forward.1} parent=1 // pred_check_branch
      %72 = sbr.rel (0) target = $region37
    $region36: #{state_lstm_forward.1} parent=1 // pred_region
      %73 = dma.done [#allocation6], 512
    $region37: #{state_lstm_forward.1} parent=1 // pred_fallthru
      _
    // Predicated region
    $region38: #{state_lstm_forward.1} parent=1 // pred_check
      _
    $region39: #{state_lstm_forward.1} parent=1 // pred_check_branch
      %75 = sbr.rel (0) target = $region41
    $region40: #{state_lstm_forward.1} parent=1 // pred_region
      %76 = dma.done [#allocation9], 512
    $region41: #{state_lstm_forward.1} parent=1 // pred_fallthru
      _
    %v77 = vld [vmem:[#allocation2] sm:$0xff]
    %v78 = vld [vmem:[#allocation5] sm:$0xff]
    %v79 = vld [vmem:[#allocation5 + $0x8] sm:$0xff]
    %v80 = vld [vmem:[%s3] sm:$0x1]
    %v82 = vlaneseq
    %v83 = vshrl.u32 %v82, 7
    %v84 = vsub.s32 0, %v83
    %v85 = vrot.slane %v80, %v84
    %vm87 = vcmask 130048
    %v89 = vsel %vm87, %v77, 0
    %91 = vmatprep.subr.mxu0 0.0
    %92 = vmatpush1.msra.mxu0 %v78
    %93 = vmatprep.subr.mxu0 0.0
    %94 = vmatpush1.msra.mxu0 %v79
    %95 = vmatprep.subr.mxu0 0.0
    %96 = vmatpush1.msra.mxu0 0.0
    %97 = vmatprep.subr.mxu0 0.0
    %98 = vmatpush1.msra.mxu0 0.0
    %99 = vmatprep.subr.mxu0 0.0
    %100 = vmatpush1.msra.mxu0 0.0
    %101 = vmatprep.subr.mxu0 0.0
    %102 = vmatpush1.msra.mxu0 0.0
    %103 = vmatprep.subr.mxu0 0.0
    %104 = vmatpush1.msra.mxu0 0.0
    %105 = vmatprep.subr.mxu0 0.0
    %106 = vmatpush1.msra.mxu0 0.0
    %107 = vmatprep.subr.mxu0 0.0
    %108 = vmatpush1.msra.mxu0 0.0
    %109 = vmatprep.subr.mxu0 0.0
    %110 = vmatpush1.msra.mxu0 0.0
    %111 = vmatprep.subr.mxu0 0.0
    %112 = vmatpush1.msra.mxu0 0.0
    %113 = vmatprep.subr.mxu0 0.0
    %114 = vmatpush1.msra.mxu0 0.0
    %115 = vmatprep.subr.mxu0 0.0
    %116 = vmatpush1.msra.mxu0 0.0
    %117 = vmatprep.subr.mxu0 0.0
    %118 = vmatpush1.msra.mxu0 0.0
    %119 = vmatprep.subr.mxu0 0.0
    %120 = vmatpush1.msra.mxu0 0.0
    %121 = vmatprep.subr.mxu0 0.0
    %122 = vmatpush1.msra.mxu0 0.0
    %123 = vmatprep.subr.mxu0 0.0
    %124 = vmatpush1.msra.mxu0 0.0
    %125 = vmatprep.subr.mxu0 0.0
    %126 = vmatpush1.msra.mxu0 0.0
    %127 = vmatprep.subr.mxu0 0.0
    %128 = vmatpush1.msra.mxu0 0.0
    %129 = vmatprep.subr.mxu0 0.0
    %130 = vmatpush1.msra.mxu0 0.0
    %131 = vmatprep.subr.mxu0 0.0
    %132 = vmatpush1.msra.mxu0 0.0
    %133 = vmatprep.subr.mxu0 0.0
    %134 = vmatpush1.msra.mxu0 0.0
    %135 = vmatprep.subr.mxu0 0.0
    %136 = vmatpush1.msra.mxu0 0.0
    %137 = vmatprep.subr.mxu0 0.0
    %138 = vmatpush1.msra.mxu0 0.0
    %139 = vmatprep.subr.mxu0 0.0
    %140 = vmatpush1.msra.mxu0 0.0
    %141 = vmatprep.subr.mxu0 0.0
    %142 = vmatpush1.msra.mxu0 0.0
    %143 = vmatprep.subr.mxu0 0.0
    %144 = vmatpush1.msra.mxu0 0.0
    %145 = vmatprep.subr.mxu0 0.0
    %146 = vmatpush1.msra.mxu0 0.0
    %147 = vmatprep.subr.mxu0 0.0
    %148 = vmatpush1.msra.mxu0 0.0
    %149 = vmatprep.subr.mxu0 0.0
    %150 = vmatpush1.msra.mxu0 0.0
    %151 = vmatprep.subr.mxu0 0.0
    %152 = vmatpush1.msra.mxu0 0.0
    %153 = vmatprep.subr.mxu0 0.0
    %154 = vmatpush1.msra.mxu0 0.0
    %155 = vmatprep.mubr.f32.mxu0 0.0
    %156 = vmatmul.mubr.f32.gmra.mrb[0].mxu0 %v89
    %v157 = vpop.f32.mrb[0].mxu0
    %v158 = vadd.f32 %v85, %v157
    %v159 = vpop.f32.mrb[0].mxu0
    %160 = vdwg.mxu0
    %v161 = vlaneseq
    %v162 = vand.u32 %v161, 127
    %vm163 = vcmp.ge.s32.totalorder %v162, 64
    %vm164 = vcmp.lt.s32.totalorder %v162, 96
    %vm165 = vmand %vm163, %vm164
    %v166 = vsel %vm165, 1.0, 0.5
    %v167 = vsel %vm165, 0.0, 0.5
    %v168 = vld [vmem:[#allocation7] sm:$0xff]
    %v169 = vld [vmem:[#allocation7 + $0x8] sm:$0xff]
    %v170 = vld [vmem:[#allocation7 + $0x10] sm:$0xff]
    %v171 = vld [vmem:[#allocation7 + $0x18] sm:$0xff]
    %vm172 = vcmask 261120
    %v174 = vsel %vm172, 0.0, 0
    %176 = vmatprep.subr.mxu0 0.0
    %177 = vmatpush1.msra.mxu0 %v168
    %178 = vmatprep.subr.mxu0 0.0
    %179 = vmatpush1.msra.mxu0 %v169
    %180 = vmatprep.subr.mxu0 0.0
    %181 = vmatpush1.msra.mxu0 %v170
    %182 = vmatprep.subr.mxu0 0.0
    %183 = vmatpush1.msra.mxu0 %v171
    %184 = vmatprep.subr.mxu0 0.0
    %185 = vmatpush1.msra.mxu0 0.0
    %186 = vmatprep.subr.mxu0 0.0
    %187 = vmatpush1.msra.mxu0 0.0
    %188 = vmatprep.subr.mxu0 0.0
    %189 = vmatpush1.msra.mxu0 0.0
    %190 = vmatprep.subr.mxu0 0.0
    %191 = vmatpush1.msra.mxu0 0.0
    %192 = vmatprep.subr.mxu0 0.0
    %193 = vmatpush1.msra.mxu0 0.0
    %194 = vmatprep.subr.mxu0 0.0
    %195 = vmatpush1.msra.mxu0 0.0
    %196 = vmatprep.subr.mxu0 0.0
    %197 = vmatpush1.msra.mxu0 0.0
    %198 = vmatprep.subr.mxu0 0.0
    %199 = vmatpush1.msra.mxu0 0.0
    %200 = vmatprep.subr.mxu0 0.0
    %201 = vmatpush1.msra.mxu0 0.0
    %202 = vmatprep.subr.mxu0 0.0
    %203 = vmatpush1.msra.mxu0 0.0
    %204 = vmatprep.subr.mxu0 0.0
    %205 = vmatpush1.msra.mxu0 0.0
    %206 = vmatprep.subr.mxu0 0.0
    %207 = vmatpush1.msra.mxu0 0.0
    %208 = vmatprep.subr.mxu0 0.0
    %209 = vmatpush1.msra.mxu0 0.0
    %210 = vmatprep.subr.mxu0 0.0
    %211 = vmatpush1.msra.mxu0 0.0
    %212 = vmatprep.subr.mxu0 0.0
    %213 = vmatpush1.msra.mxu0 0.0
    %214 = vmatprep.subr.mxu0 0.0
    %215 = vmatpush1.msra.mxu0 0.0
    %216 = vmatprep.subr.mxu0 0.0
    %217 = vmatpush1.msra.mxu0 0.0
    %218 = vmatprep.subr.mxu0 0.0
    %219 = vmatpush1.msra.mxu0 0.0
    %220 = vmatprep.subr.mxu0 0.0
    %221 = vmatpush1.msra.mxu0 0.0
    %222 = vmatprep.subr.mxu0 0.0
    %223 = vmatpush1.msra.mxu0 0.0
    %224 = vmatprep.subr.mxu0 0.0
    %225 = vmatpush1.msra.mxu0 0.0
    %226 = vmatprep.subr.mxu0 0.0
    %227 = vmatpush1.msra.mxu0 0.0
    %228 = vmatprep.subr.mxu0 0.0
    %229 = vmatpush1.msra.mxu0 0.0
    %230 = vmatprep.subr.mxu0 0.0
    %231 = vmatpush1.msra.mxu0 0.0
    %232 = vmatprep.subr.mxu0 0.0
    %233 = vmatpush1.msra.mxu0 0.0
    %234 = vmatprep.subr.mxu0 0.0
    %235 = vmatpush1.msra.mxu0 0.0
    %236 = vmatprep.subr.mxu0 0.0
    %237 = vmatpush1.msra.mxu0 0.0
    %238 = vmatprep.subr.mxu0 0.0
    %239 = vmatpush1.msra.mxu0 0.0
    %240 = vmatprep.mubr.f32.mxu0 0.0
    %241 = vmatmul.mubr.f32.gmra.mrb[0].mxu0 %v174
    %v242 = vpop.f32.mrb[0].mxu0
    %v243 = vadd.f32 0.0, %v242
    %v244 = vpop.f32.mrb[0].mxu0
    %245 = vdwg.mxu0
    %v246 = vadd.f32 %v158, %v243
    %v247 = vmul.f32 %v246, 0.5
    %v248 = vtanh.pop %v247
    %v249 = vmul.f32 %v248, %v166
    %v250 = vadd.f32 %v249, %v167
    %v251 = vmul.f32 %v250, 0.0
    %253 = vrot.lane.b32.xlu0 %v250, 64
    %v254 = vpop.permute.xlu0 %253
    %v256 = vmul.f32 %v250, %v254
    %258 = vrot.lane.b32.xlu0 %v256, 32
    %v259 = vpop.permute.xlu0 %258
    %v261 = vadd.f32 %v251, %v259
    %v262 = vtanh.pop %v261
    %264 = vrot.lane.b32.xlu0 %v262, 64
    %v265 = vpop.permute.xlu0 %264
    %v267 = vmul.f32 %v250, %v265
    %269 = vrot.lane.b32.xlu0 %v267, 32
    %v270 = vpop.permute.xlu0 %269
    %v271 = vsel %vm172, %v270, 0
    %273 = vmatprep.subr.mxu0 0.0
    %274 = vmatpush1.msra.mxu0 %v168
    %275 = vmatprep.subr.mxu0 0.0
    %276 = vmatpush1.msra.mxu0 %v169
    %277 = vmatprep.subr.mxu0 0.0
    %278 = vmatpush1.msra.mxu0 %v170
    %279 = vmatprep.subr.mxu0 0.0
    %280 = vmatpush1.msra.mxu0 %v171
    %281 = vmatprep.subr.mxu0 0.0
    %282 = vmatpush1.msra.mxu0 0.0
    %283 = vmatprep.subr.mxu0 0.0
    %284 = vmatpush1.msra.mxu0 0.0
    %285 = vmatprep.subr.mxu0 0.0
    %286 = vmatpush1.msra.mxu0 0.0
    %287 = vmatprep.subr.mxu0 0.0
    %288 = vmatpush1.msra.mxu0 0.0
    %289 = vmatprep.subr.mxu0 0.0
    %290 = vmatpush1.msra.mxu0 0.0
    %291 = vmatprep.subr.mxu0 0.0
    %292 = vmatpush1.msra.mxu0 0.0
    %293 = vmatprep.subr.mxu0 0.0
    %294 = vmatpush1.msra.mxu0 0.0
    %295 = vmatprep.subr.mxu0 0.0
    %296 = vmatpush1.msra.mxu0 0.0
    %297 = vmatprep.subr.mxu0 0.0
    %298 = vmatpush1.msra.mxu0 0.0
    %299 = vmatprep.subr.mxu0 0.0
    %300 = vmatpush1.msra.mxu0 0.0
    %301 = vmatprep.subr.mxu0 0.0
    %302 = vmatpush1.msra.mxu0 0.0
    %303 = vmatprep.subr.mxu0 0.0
    %304 = vmatpush1.msra.mxu0 0.0
    %305 = vmatprep.subr.mxu0 0.0
    %306 = vmatpush1.msra.mxu0 0.0
    %307 = vmatprep.subr.mxu0 0.0
    %308 = vmatpush1.msra.mxu0 0.0
    %309 = vmatprep.subr.mxu0 0.0
    %310 = vmatpush1.msra.mxu0 0.0
    %311 = vmatprep.subr.mxu0 0.0
    %312 = vmatpush1.msra.mxu0 0.0
    %313 = vmatprep.subr.mxu0 0.0
    %314 = vmatpush1.msra.mxu0 0.0
    %315 = vmatprep.subr.mxu0 0.0
    %316 = vmatpush1.msra.mxu0 0.0
    %317 = vmatprep.subr.mxu0 0.0
    %318 = vmatpush1.msra.mxu0 0.0
    %319 = vmatprep.subr.mxu0 0.0
    %320 = vmatpush1.msra.mxu0 0.0
    %321 = vmatprep.subr.mxu0 0.0
    %322 = vmatpush1.msra.mxu0 0.0
    %323 = vmatprep.subr.mxu0 0.0
    %324 = vmatpush1.msra.mxu0 0.0
    %325 = vmatprep.subr.mxu0 0.0
    %326 = vmatpush1.msra.mxu0 0.0
    %327 = vmatprep.subr.mxu0 0.0
    %328 = vmatpush1.msra.mxu0 0.0
    %329 = vmatprep.subr.mxu0 0.0
    %330 = vmatpush1.msra.mxu0 0.0
    %331 = vmatprep.subr.mxu0 0.0
    %332 = vmatpush1.msra.mxu0 0.0
    %333 = vmatprep.subr.mxu0 0.0
    %334 = vmatpush1.msra.mxu0 0.0
    %335 = vmatprep.subr.mxu0 0.0
    %336 = vmatpush1.msra.mxu0 0.0
    %337 = vmatprep.mubr.f32.mxu0 0.0
    %338 = vmatmul.mubr.f32.gmra.mrb[0].mxu0 %v271
    %v339 = vpop.f32.mrb[0].mxu0
    %v340 = vadd.f32 0.0, %v339
    %v341 = vpop.f32.mrb[0].mxu0
    %342 = vdwg.mxu0
    %v344 = vrot.slane %v340, 7
    %v346 = vadd.f32 %v158, %v344
    %v347 = vmul.f32 %v346, 0.5
    %v348 = vtanh.pop %v347
    %v349 = vmul.f32 %v348, %v166
    %v350 = vadd.f32 %v349, %v167
    %v352 = vrot.slane %v261, 7
    %v354 = vmul.f32 %v350, %v352
    %356 = vrot.lane.b32.xlu0 %v350, 64
    %v357 = vpop.permute.xlu0 %356
    %v359 = vmul.f32 %v350, %v357
    %361 = vrot.lane.b32.xlu0 %v359, 32
    %v362 = vpop.permute.xlu0 %361
    %v364 = vadd.f32 %v354, %v362
    %v365 = vtanh.pop %v364
    %367 = vrot.lane.b32.xlu0 %v365, 64
    %v368 = vpop.permute.xlu0 %367
    %v370 = vmul.f32 %v350, %v368
    %v372 = vrot.slane %v370, 1
    %373 = vrot.lane.b32.xlu0 %v372, 32
    %v374 = vpop.permute.xlu0 %373
    %v375 = vsel %vm172, %v374, 0
    %377 = vmatprep.subr.mxu0 0.0
    %378 = vmatpush1.msra.mxu0 %v168
    %379 = vmatprep.subr.mxu0 0.0
    %380 = vmatpush1.msra.mxu0 %v169
    %381 = vmatprep.subr.mxu0 0.0
    %382 = vmatpush1.msra.mxu0 %v170
    %383 = vmatprep.subr.mxu0 0.0
    %384 = vmatpush1.msra.mxu0 %v171
    %385 = vmatprep.subr.mxu0 0.0
    %386 = vmatpush1.msra.mxu0 0.0
    %387 = vmatprep.subr.mxu0 0.0
    %388 = vmatpush1.msra.mxu0 0.0
    %389 = vmatprep.subr.mxu0 0.0
    %390 = vmatpush1.msra.mxu0 0.0
    %391 = vmatprep.subr.mxu0 0.0
    %392 = vmatpush1.msra.mxu0 0.0
    %393 = vmatprep.subr.mxu0 0.0
    %394 = vmatpush1.msra.mxu0 0.0
    %395 = vmatprep.subr.mxu0 0.0
    %396 = vmatpush1.msra.mxu0 0.0
    %397 = vmatprep.subr.mxu0 0.0
    %398 = vmatpush1.msra.mxu0 0.0
    %399 = vmatprep.subr.mxu0 0.0
    %400 = vmatpush1.msra.mxu0 0.0
    %401 = vmatprep.subr.mxu0 0.0
    %402 = vmatpush1.msra.mxu0 0.0
    %403 = vmatprep.subr.mxu0 0.0
    %404 = vmatpush1.msra.mxu0 0.0
    %405 = vmatprep.subr.mxu0 0.0
    %406 = vmatpush1.msra.mxu0 0.0
    %407 = vmatprep.subr.mxu0 0.0
    %408 = vmatpush1.msra.mxu0 0.0
    %409 = vmatprep.subr.mxu0 0.0
    %410 = vmatpush1.msra.mxu0 0.0
    %411 = vmatprep.subr.mxu0 0.0
    %412 = vmatpush1.msra.mxu0 0.0
    %413 = vmatprep.subr.mxu0 0.0
    %414 = vmatpush1.msra.mxu0 0.0
    %415 = vmatprep.subr.mxu0 0.0
    %416 = vmatpush1.msra.mxu0 0.0
    %417 = vmatprep.subr.mxu0 0.0
    %418 = vmatpush1.msra.mxu0 0.0
    %419 = vmatprep.subr.mxu0 0.0
    %420 = vmatpush1.msra.mxu0 0.0
    %421 = vmatprep.subr.mxu0 0.0
    %422 = vmatpush1.msra.mxu0 0.0
    %423 = vmatprep.subr.mxu0 0.0
    %424 = vmatpush1.msra.mxu0 0.0
    %425 = vmatprep.subr.mxu0 0.0
    %426 = vmatpush1.msra.mxu0 0.0
    %427 = vmatprep.subr.mxu0 0.0
    %428 = vmatpush1.msra.mxu0 0.0
    %429 = vmatprep.subr.mxu0 0.0
    %430 = vmatpush1.msra.mxu0 0.0
    %431 = vmatprep.subr.mxu0 0.0
    %432 = vmatpush1.msra.mxu0 0.0
    %433 = vmatprep.subr.mxu0 0.0
    %434 = vmatpush1.msra.mxu0 0.0
    %435 = vmatprep.subr.mxu0 0.0
    %436 = vmatpush1.msra.mxu0 0.0
    %437 = vmatprep.subr.mxu0 0.0
    %438 = vmatpush1.msra.mxu0 0.0
    %439 = vmatprep.subr.mxu0 0.0
    %440 = vmatpush1.msra.mxu0 0.0
    %441 = vmatprep.mubr.f32.mxu0 0.0
    %442 = vmatmul.mubr.f32.gmra.mrb[0].mxu0 %v375
    %v443 = vpop.f32.mrb[0].mxu0
    %v444 = vadd.f32 0.0, %v443
    %v445 = vpop.f32.mrb[0].mxu0
    %446 = vdwg.mxu0
    %v448 = vrot.slane %v444, 6
    %v450 = vadd.f32 %v158, %v448
    %v451 = vmul.f32 %v450, 0.5
    %v452 = vtanh.pop %v451
    %v453 = vmul.f32 %v452, %v166
    %v454 = vadd.f32 %v453, %v167
    %v456 = vrot.slane %v364, 7
    %v458 = vmul.f32 %v454, %v456
    %460 = vrot.lane.b32.xlu0 %v454, 64
    %v461 = vpop.permute.xlu0 %460
    %v463 = vmul.f32 %v454, %v461
    %465 = vrot.lane.b32.xlu0 %v463, 32
    %v466 = vpop.permute.xlu0 %465
    %v468 = vadd.f32 %v458, %v466
    %v469 = vtanh.pop %v468
    %471 = vrot.lane.b32.xlu0 %v469, 64
    %v472 = vpop.permute.xlu0 %471
    %v474 = vmul.f32 %v454, %v472
    %v476 = vrot.slane %v474, 2
    %477 = vrot.lane.b32.xlu0 %v476, 32
    %v478 = vpop.permute.xlu0 %477
    %v479 = vsel %vm172, %v478, 0
    %481 = vmatprep.subr.mxu0 0.0
    %482 = vmatpush1.msra.mxu0 %v168
    %483 = vmatprep.subr.mxu0 0.0
    %484 = vmatpush1.msra.mxu0 %v169
    %485 = vmatprep.subr.mxu0 0.0
    %486 = vmatpush1.msra.mxu0 %v170
    %487 = vmatprep.subr.mxu0 0.0
    %488 = vmatpush1.msra.mxu0 %v171
    %489 = vmatprep.subr.mxu0 0.0
    %490 = vmatpush1.msra.mxu0 0.0
    %491 = vmatprep.subr.mxu0 0.0
    %492 = vmatpush1.msra.mxu0 0.0
    %493 = vmatprep.subr.mxu0 0.0
    %494 = vmatpush1.msra.mxu0 0.0
    %495 = vmatprep.subr.mxu0 0.0
    %496 = vmatpush1.msra.mxu0 0.0
    %497 = vmatprep.subr.mxu0 0.0
    %498 = vmatpush1.msra.mxu0 0.0
    %499 = vmatprep.subr.mxu0 0.0
    %500 = vmatpush1.msra.mxu0 0.0
    %501 = vmatprep.subr.mxu0 0.0
    %502 = vmatpush1.msra.mxu0 0.0
    %503 = vmatprep.subr.mxu0 0.0
    %504 = vmatpush1.msra.mxu0 0.0
    %505 = vmatprep.subr.mxu0 0.0
    %506 = vmatpush1.msra.mxu0 0.0
    %507 = vmatprep.subr.mxu0 0.0
    %508 = vmatpush1.msra.mxu0 0.0
    %509 = vmatprep.subr.mxu0 0.0
    %510 = vmatpush1.msra.mxu0 0.0
    %511 = vmatprep.subr.mxu0 0.0
    %512 = vmatpush1.msra.mxu0 0.0
    %513 = vmatprep.subr.mxu0 0.0
    %514 = vmatpush1.msra.mxu0 0.0
    %515 = vmatprep.subr.mxu0 0.0
    %516 = vmatpush1.msra.mxu0 0.0
    %517 = vmatprep.subr.mxu0 0.0
    %518 = vmatpush1.msra.mxu0 0.0
    %519 = vmatprep.subr.mxu0 0.0
    %520 = vmatpush1.msra.mxu0 0.0
    %521 = vmatprep.subr.mxu0 0.0
    %522 = vmatpush1.msra.mxu0 0.0
    %523 = vmatprep.subr.mxu0 0.0
    %524 = vmatpush1.msra.mxu0 0.0
    %525 = vmatprep.subr.mxu0 0.0
    %526 = vmatpush1.msra.mxu0 0.0
    %527 = vmatprep.subr.mxu0 0.0
    %528 = vmatpush1.msra.mxu0 0.0
    %529 = vmatprep.subr.mxu0 0.0
    %530 = vmatpush1.msra.mxu0 0.0
    %531 = vmatprep.subr.mxu0 0.0
    %532 = vmatpush1.msra.mxu0 0.0
    %533 = vmatprep.subr.mxu0 0.0
    %534 = vmatpush1.msra.mxu0 0.0
    %535 = vmatprep.subr.mxu0 0.0
    %536 = vmatpush1.msra.mxu0 0.0
    %537 = vmatprep.subr.mxu0 0.0
    %538 = vmatpush1.msra.mxu0 0.0
    %539 = vmatprep.subr.mxu0 0.0
    %540 = vmatpush1.msra.mxu0 0.0
    %541 = vmatprep.subr.mxu0 0.0
    %542 = vmatpush1.msra.mxu0 0.0
    %543 = vmatprep.subr.mxu0 0.0
    %544 = vmatpush1.msra.mxu0 0.0
    %545 = vmatprep.mubr.f32.mxu0 0.0
    %546 = vmatmul.mubr.f32.gmra.mrb[0].mxu0 %v479
    %v547 = vpop.f32.mrb[0].mxu0
    %v548 = vadd.f32 0.0, %v547
    %v549 = vpop.f32.mrb[0].mxu0
    %550 = vdwg.mxu0
    %v552 = vrot.slane %v548, 5
    %v554 = vadd.f32 %v158, %v552
    %v555 = vmul.f32 %v554, 0.5
    %v556 = vtanh.pop %v555
    %v557 = vmul.f32 %v556, %v166
    %v558 = vadd.f32 %v557, %v167
    %v560 = vrot.slane %v468, 7
    %v562 = vmul.f32 %v558, %v560
    %564 = vrot.lane.b32.xlu0 %v558, 64
    %v565 = vpop.permute.xlu0 %564
    %v567 = vmul.f32 %v558, %v565
    %569 = vrot.lane.b32.xlu0 %v567, 32
    %v570 = vpop.permute.xlu0 %569
    %v572 = vadd.f32 %v562, %v570
    %v573 = vtanh.pop %v572
    %575 = vrot.lane.b32.xlu0 %v573, 64
    %v576 = vpop.permute.xlu0 %575
    %v578 = vmul.f32 %v558, %v576
    %v580 = vrot.slane %v578, 3
    %581 = vrot.lane.b32.xlu0 %v580, 32
    %v582 = vpop.permute.xlu0 %581
    %v583 = vsel %vm172, %v582, 0
    %585 = vmatprep.subr.mxu0 0.0
    %586 = vmatpush1.msra.mxu0 %v168
    %587 = vmatprep.subr.mxu0 0.0
    %588 = vmatpush1.msra.mxu0 %v169
    %589 = vmatprep.subr.mxu0 0.0
    %590 = vmatpush1.msra.mxu0 %v170
    %591 = vmatprep.subr.mxu0 0.0
    %592 = vmatpush1.msra.mxu0 %v171
    %593 = vmatprep.subr.mxu0 0.0
    %594 = vmatpush1.msra.mxu0 0.0
    %595 = vmatprep.subr.mxu0 0.0
    %596 = vmatpush1.msra.mxu0 0.0
    %597 = vmatprep.subr.mxu0 0.0
    %598 = vmatpush1.msra.mxu0 0.0
    %599 = vmatprep.subr.mxu0 0.0
    %600 = vmatpush1.msra.mxu0 0.0
    %601 = vmatprep.subr.mxu0 0.0
    %602 = vmatpush1.msra.mxu0 0.0
    %603 = vmatprep.subr.mxu0 0.0
    %604 = vmatpush1.msra.mxu0 0.0
    %605 = vmatprep.subr.mxu0 0.0
    %606 = vmatpush1.msra.mxu0 0.0
    %607 = vmatprep.subr.mxu0 0.0
    %608 = vmatpush1.msra.mxu0 0.0
    %609 = vmatprep.subr.mxu0 0.0
    %610 = vmatpush1.msra.mxu0 0.0
    %611 = vmatprep.subr.mxu0 0.0
    %612 = vmatpush1.msra.mxu0 0.0
    %613 = vmatprep.subr.mxu0 0.0
    %614 = vmatpush1.msra.mxu0 0.0
    %615 = vmatprep.subr.mxu0 0.0
    %616 = vmatpush1.msra.mxu0 0.0
    %617 = vmatprep.subr.mxu0 0.0
    %618 = vmatpush1.msra.mxu0 0.0
    %619 = vmatprep.subr.mxu0 0.0
    %620 = vmatpush1.msra.mxu0 0.0
    %621 = vmatprep.subr.mxu0 0.0
    %622 = vmatpush1.msra.mxu0 0.0
    %623 = vmatprep.subr.mxu0 0.0
    %624 = vmatpush1.msra.mxu0 0.0
    %625 = vmatprep.subr.mxu0 0.0
    %626 = vmatpush1.msra.mxu0 0.0
    %627 = vmatprep.subr.mxu0 0.0
    %628 = vmatpush1.msra.mxu0 0.0
    %629 = vmatprep.subr.mxu0 0.0
    %630 = vmatpush1.msra.mxu0 0.0
    %631 = vmatprep.subr.mxu0 0.0
    %632 = vmatpush1.msra.mxu0 0.0
    %633 = vmatprep.subr.mxu0 0.0
    %634 = vmatpush1.msra.mxu0 0.0
    %635 = vmatprep.subr.mxu0 0.0
    %636 = vmatpush1.msra.mxu0 0.0
    %637 = vmatprep.subr.mxu0 0.0
    %638 = vmatpush1.msra.mxu0 0.0
    %639 = vmatprep.subr.mxu0 0.0
    %640 = vmatpush1.msra.mxu0 0.0
    %641 = vmatprep.subr.mxu0 0.0
    %642 = vmatpush1.msra.mxu0 0.0
    %643 = vmatprep.subr.mxu0 0.0
    %644 = vmatpush1.msra.mxu0 0.0
    %645 = vmatprep.subr.mxu0 0.0
    %646 = vmatpush1.msra.mxu0 0.0
    %647 = vmatprep.subr.mxu0 0.0
    %648 = vmatpush1.msra.mxu0 0.0
    %649 = vmatprep.mubr.f32.mxu0 0.0
    %650 = vmatmul.mubr.f32.gmra.mrb[0].mxu0 %v583
    %v651 = vpop.f32.mrb[0].mxu0
    %v652 = vadd.f32 0.0, %v651
    %v653 = vpop.f32.mrb[0].mxu0
    %654 = vdwg.mxu0
    %v656 = vrot.slane %v652, 4
    %v658 = vadd.f32 %v158, %v656
    %v659 = vmul.f32 %v658, 0.5
    %v660 = vtanh.pop %v659
    %v661 = vmul.f32 %v660, %v166
    %v662 = vadd.f32 %v661, %v167
    %v664 = vrot.slane %v572, 7
    %v666 = vmul.f32 %v662, %v664
    %668 = vrot.lane.b32.xlu0 %v662, 64
    %v669 = vpop.permute.xlu0 %668
    %v671 = vmul.f32 %v662, %v669
    %673 = vrot.lane.b32.xlu0 %v671, 32
    %v674 = vpop.permute.xlu0 %673
    %v676 = vadd.f32 %v666, %v674
    %v677 = vtanh.pop %v676
    %679 = vrot.lane.b32.xlu0 %v677, 64
    %v680 = vpop.permute.xlu0 %679
    %v682 = vmul.f32 %v662, %v680
    %v684 = vrot.slane %v682, 4
    %685 = vrot.lane.b32.xlu0 %v684, 32
    %v686 = vpop.permute.xlu0 %685
    %v687 = vsel %vm172, %v686, 0
    %689 = vmatprep.subr.mxu0 0.0
    %690 = vmatpush1.msra.mxu0 %v168
    %691 = vmatprep.subr.mxu0 0.0
    %692 = vmatpush1.msra.mxu0 %v169
    %693 = vmatprep.subr.mxu0 0.0
    %694 = vmatpush1.msra.mxu0 %v170
    %695 = vmatprep.subr.mxu0 0.0
    %696 = vmatpush1.msra.mxu0 %v171
    %697 = vmatprep.subr.mxu0 0.0
    %698 = vmatpush1.msra.mxu0 0.0
    %699 = vmatprep.subr.mxu0 0.0
    %700 = vmatpush1.msra.mxu0 0.0
    %701 = vmatprep.subr.mxu0 0.0
    %702 = vmatpush1.msra.mxu0 0.0
    %703 = vmatprep.subr.mxu0 0.0
    %704 = vmatpush1.msra.mxu0 0.0
    %705 = vmatprep.subr.mxu0 0.0
    %706 = vmatpush1.msra.mxu0 0.0
    %707 = vmatprep.subr.mxu0 0.0
    %708 = vmatpush1.msra.mxu0 0.0
    %709 = vmatprep.subr.mxu0 0.0
    %710 = vmatpush1.msra.mxu0 0.0
    %711 = vmatprep.subr.mxu0 0.0
    %712 = vmatpush1.msra.mxu0 0.0
    %713 = vmatprep.subr.mxu0 0.0
    %714 = vmatpush1.msra.mxu0 0.0
    %715 = vmatprep.subr.mxu0 0.0
    %716 = vmatpush1.msra.mxu0 0.0
    %717 = vmatprep.subr.mxu0 0.0
    %718 = vmatpush1.msra.mxu0 0.0
    %719 = vmatprep.subr.mxu0 0.0
    %720 = vmatpush1.msra.mxu0 0.0
    %721 = vmatprep.subr.mxu0 0.0
    %722 = vmatpush1.msra.mxu0 0.0
    %723 = vmatprep.subr.mxu0 0.0
    %724 = vmatpush1.msra.mxu0 0.0
    %725 = vmatprep.subr.mxu0 0.0
    %726 = vmatpush1.msra.mxu0 0.0
    %727 = vmatprep.subr.mxu0 0.0
    %728 = vmatpush1.msra.mxu0 0.0
    %729 = vmatprep.subr.mxu0 0.0
    %730 = vmatpush1.msra.mxu0 0.0
    %731 = vmatprep.subr.mxu0 0.0
    %732 = vmatpush1.msra.mxu0 0.0
    %733 = vmatprep.subr.mxu0 0.0
    %734 = vmatpush1.msra.mxu0 0.0
    %735 = vmatprep.subr.mxu0 0.0
    %736 = vmatpush1.msra.mxu0 0.0
    %737 = vmatprep.subr.mxu0 0.0
    %738 = vmatpush1.msra.mxu0 0.0
    %739 = vmatprep.subr.mxu0 0.0
    %740 = vmatpush1.msra.mxu0 0.0
    %741 = vmatprep.subr.mxu0 0.0
    %742 = vmatpush1.msra.mxu0 0.0
    %743 = vmatprep.subr.mxu0 0.0
    %744 = vmatpush1.msra.mxu0 0.0
    %745 = vmatprep.subr.mxu0 0.0
    %746 = vmatpush1.msra.mxu0 0.0
    %747 = vmatprep.subr.mxu0 0.0
    %748 = vmatpush1.msra.mxu0 0.0
    %749 = vmatprep.subr.mxu0 0.0
    %750 = vmatpush1.msra.mxu0 0.0
    %751 = vmatprep.subr.mxu0 0.0
    %752 = vmatpush1.msra.mxu0 0.0
    %753 = vmatprep.mubr.f32.mxu0 0.0
    %754 = vmatmul.mubr.f32.gmra.mrb[0].mxu0 %v687
    %v755 = vpop.f32.mrb[0].mxu0
    %v756 = vadd.f32 0.0, %v755
    %v757 = vpop.f32.mrb[0].mxu0
    %758 = vdwg.mxu0
    %v760 = vrot.slane %v756, 3
    %v762 = vadd.f32 %v158, %v760
    %v763 = vmul.f32 %v762, 0.5
    %v764 = vtanh.pop %v763
    %v765 = vmul.f32 %v764, %v166
    %v766 = vadd.f32 %v765, %v167
    %v768 = vrot.slane %v676, 7
    %v770 = vmul.f32 %v766, %v768
    %772 = vrot.lane.b32.xlu0 %v766, 64
    %v773 = vpop.permute.xlu0 %772
    %v775 = vmul.f32 %v766, %v773
    %777 = vrot.lane.b32.xlu0 %v775, 32
    %v778 = vpop.permute.xlu0 %777
    %v780 = vadd.f32 %v770, %v778
    %v781 = vtanh.pop %v780
    %783 = vrot.lane.b32.xlu0 %v781, 64
    %v784 = vpop.permute.xlu0 %783
    %v786 = vmul.f32 %v766, %v784
    %v788 = vrot.slane %v786, 5
    %789 = vrot.lane.b32.xlu0 %v788, 32
    %v790 = vpop.permute.xlu0 %789
    %v791 = vsel %vm172, %v790, 0
    %793 = vmatprep.subr.mxu0 0.0
    %794 = vmatpush1.msra.mxu0 %v168
    %795 = vmatprep.subr.mxu0 0.0
    %796 = vmatpush1.msra.mxu0 %v169
    %797 = vmatprep.subr.mxu0 0.0
    %798 = vmatpush1.msra.mxu0 %v170
    %799 = vmatprep.subr.mxu0 0.0
    %800 = vmatpush1.msra.mxu0 %v171
    %801 = vmatprep.subr.mxu0 0.0
    %802 = vmatpush1.msra.mxu0 0.0
    %803 = vmatprep.subr.mxu0 0.0
    %804 = vmatpush1.msra.mxu0 0.0
    %805 = vmatprep.subr.mxu0 0.0
    %806 = vmatpush1.msra.mxu0 0.0
    %807 = vmatprep.subr.mxu0 0.0
    %808 = vmatpush1.msra.mxu0 0.0
    %809 = vmatprep.subr.mxu0 0.0
    %810 = vmatpush1.msra.mxu0 0.0
    %811 = vmatprep.subr.mxu0 0.0
    %812 = vmatpush1.msra.mxu0 0.0
    %813 = vmatprep.subr.mxu0 0.0
    %814 = vmatpush1.msra.mxu0 0.0
    %815 = vmatprep.subr.mxu0 0.0
    %816 = vmatpush1.msra.mxu0 0.0
    %817 = vmatprep.subr.mxu0 0.0
    %818 = vmatpush1.msra.mxu0 0.0
    %819 = vmatprep.subr.mxu0 0.0
    %820 = vmatpush1.msra.mxu0 0.0
    %821 = vmatprep.subr.mxu0 0.0
    %822 = vmatpush1.msra.mxu0 0.0
    %823 = vmatprep.subr.mxu0 0.0
    %824 = vmatpush1.msra.mxu0 0.0
    %825 = vmatprep.subr.mxu0 0.0
    %826 = vmatpush1.msra.mxu0 0.0
    %827 = vmatprep.subr.mxu0 0.0
    %828 = vmatpush1.msra.mxu0 0.0
    %829 = vmatprep.subr.mxu0 0.0
    %830 = vmatpush1.msra.mxu0 0.0
    %831 = vmatprep.subr.mxu0 0.0
    %832 = vmatpush1.msra.mxu0 0.0
    %833 = vmatprep.subr.mxu0 0.0
    %834 = vmatpush1.msra.mxu0 0.0
    %835 = vmatprep.subr.mxu0 0.0
    %836 = vmatpush1.msra.mxu0 0.0
    %837 = vmatprep.subr.mxu0 0.0
    %838 = vmatpush1.msra.mxu0 0.0
    %839 = vmatprep.subr.mxu0 0.0
    %840 = vmatpush1.msra.mxu0 0.0
    %841 = vmatprep.subr.mxu0 0.0
    %842 = vmatpush1.msra.mxu0 0.0
    %843 = vmatprep.subr.mxu0 0.0
    %844 = vmatpush1.msra.mxu0 0.0
    %845 = vmatprep.subr.mxu0 0.0
    %846 = vmatpush1.msra.mxu0 0.0
    %847 = vmatprep.subr.mxu0 0.0
    %848 = vmatpush1.msra.mxu0 0.0
    %849 = vmatprep.subr.mxu0 0.0
    %850 = vmatpush1.msra.mxu0 0.0
    %851 = vmatprep.subr.mxu0 0.0
    %852 = vmatpush1.msra.mxu0 0.0
    %853 = vmatprep.subr.mxu0 0.0
    %854 = vmatpush1.msra.mxu0 0.0
    %855 = vmatprep.subr.mxu0 0.0
    %856 = vmatpush1.msra.mxu0 0.0
    %857 = vmatprep.mubr.f32.mxu0 0.0
    %858 = vmatmul.mubr.f32.gmra.mrb[0].mxu0 %v791
    %v859 = vpop.f32.mrb[0].mxu0
    %v860 = vadd.f32 0.0, %v859
    %v861 = vpop.f32.mrb[0].mxu0
    %862 = vdwg.mxu0
    %v864 = vrot.slane %v860, 2
    %v866 = vadd.f32 %v158, %v864
    %v867 = vmul.f32 %v866, 0.5
    %v868 = vtanh.pop %v867
    %v869 = vmul.f32 %v868, %v166
    %v870 = vadd.f32 %v869, %v167
    %v872 = vrot.slane %v780, 7
    %v874 = vmul.f32 %v870, %v872
    %876 = vrot.lane.b32.xlu0 %v870, 64
    %v877 = vpop.permute.xlu0 %876
    %v879 = vmul.f32 %v870, %v877
    %881 = vrot.lane.b32.xlu0 %v879, 32
    %v882 = vpop.permute.xlu0 %881
    %v884 = vadd.f32 %v874, %v882
    %v885 = vtanh.pop %v884
    %887 = vrot.lane.b32.xlu0 %v885, 64
    %v888 = vpop.permute.xlu0 %887
    %v890 = vmul.f32 %v870, %v888
    %v892 = vrot.slane %v890, 6
    %893 = vrot.lane.b32.xlu0 %v892, 32
    %v894 = vpop.permute.xlu0 %893
    %v895 = vsel %vm172, %v894, 0
    %897 = vmatprep.subr.mxu0 0.0
    %898 = vmatpush1.msra.mxu0 %v168
    %899 = vmatprep.subr.mxu0 0.0
    %900 = vmatpush1.msra.mxu0 %v169
    %901 = vmatprep.subr.mxu0 0.0
    %902 = vmatpush1.msra.mxu0 %v170
    %903 = vmatprep.subr.mxu0 0.0
    %904 = vmatpush1.msra.mxu0 %v171
    %905 = vmatprep.subr.mxu0 0.0
    %906 = vmatpush1.msra.mxu0 0.0
    %907 = vmatprep.subr.mxu0 0.0
    %908 = vmatpush1.msra.mxu0 0.0
    %909 = vmatprep.subr.mxu0 0.0
    %910 = vmatpush1.msra.mxu0 0.0
    %911 = vmatprep.subr.mxu0 0.0
    %912 = vmatpush1.msra.mxu0 0.0
    %913 = vmatprep.subr.mxu0 0.0
    %914 = vmatpush1.msra.mxu0 0.0
    %915 = vmatprep.subr.mxu0 0.0
    %916 = vmatpush1.msra.mxu0 0.0
    %917 = vmatprep.subr.mxu0 0.0
    %918 = vmatpush1.msra.mxu0 0.0
    %919 = vmatprep.subr.mxu0 0.0
    %920 = vmatpush1.msra.mxu0 0.0
    %921 = vmatprep.subr.mxu0 0.0
    %922 = vmatpush1.msra.mxu0 0.0
    %923 = vmatprep.subr.mxu0 0.0
    %924 = vmatpush1.msra.mxu0 0.0
    %925 = vmatprep.subr.mxu0 0.0
    %926 = vmatpush1.msra.mxu0 0.0
    %927 = vmatprep.subr.mxu0 0.0
    %928 = vmatpush1.msra.mxu0 0.0
    %929 = vmatprep.subr.mxu0 0.0
    %930 = vmatpush1.msra.mxu0 0.0
    %931 = vmatprep.subr.mxu0 0.0
    %932 = vmatpush1.msra.mxu0 0.0
    %933 = vmatprep.subr.mxu0 0.0
    %934 = vmatpush1.msra.mxu0 0.0
    %935 = vmatprep.subr.mxu0 0.0
    %936 = vmatpush1.msra.mxu0 0.0
    %937 = vmatprep.subr.mxu0 0.0
    %938 = vmatpush1.msra.mxu0 0.0
    %939 = vmatprep.subr.mxu0 0.0
    %940 = vmatpush1.msra.mxu0 0.0
    %941 = vmatprep.subr.mxu0 0.0
    %942 = vmatpush1.msra.mxu0 0.0
    %943 = vmatprep.subr.mxu0 0.0
    %944 = vmatpush1.msra.mxu0 0.0
    %945 = vmatprep.subr.mxu0 0.0
    %946 = vmatpush1.msra.mxu0 0.0
    %947 = vmatprep.subr.mxu0 0.0
    %948 = vmatpush1.msra.mxu0 0.0
    %949 = vmatprep.subr.mxu0 0.0
    %950 = vmatpush1.msra.mxu0 0.0
    %951 = vmatprep.subr.mxu0 0.0
    %952 = vmatpush1.msra.mxu0 0.0
    %953 = vmatprep.subr.mxu0 0.0
    %954 = vmatpush1.msra.mxu0 0.0
    %955 = vmatprep.subr.mxu0 0.0
    %956 = vmatpush1.msra.mxu0 0.0
    %957 = vmatprep.subr.mxu0 0.0
    %958 = vmatpush1.msra.mxu0 0.0
    %959 = vmatprep.subr.mxu0 0.0
    %960 = vmatpush1.msra.mxu0 0.0
    %961 = vmatprep.mubr.f32.mxu0 0.0
    %962 = vmatmul.mubr.f32.gmra.mrb[0].mxu0 %v895
    %v963 = vpop.f32.mrb[0].mxu0
    %v964 = vadd.f32 0.0, %v963
    %v965 = vpop.f32.mrb[0].mxu0
    %966 = vdwg.mxu0
    %v968 = vrot.slane %v964, 1
    %v970 = vadd.f32 %v158, %v968
    %v971 = vmul.f32 %v970, 0.5
    %v972 = vtanh.pop %v971
    %v973 = vmul.f32 %v972, %v166
    %v974 = vadd.f32 %v973, %v167
    %v976 = vrot.slane %v884, 7
    %v978 = vmul.f32 %v974, %v976
    %980 = vrot.lane.b32.xlu0 %v974, 64
    %v981 = vpop.permute.xlu0 %980
    %v983 = vmul.f32 %v974, %v981
    %985 = vrot.lane.b32.xlu0 %v983, 32
    %v986 = vpop.permute.xlu0 %985
    %v988 = vadd.f32 %v978, %v986
    %v989 = vtanh.pop %v988
    %991 = vrot.lane.b32.xlu0 %v989, 64
    %v992 = vpop.permute.xlu0 %991
    %v994 = vmul.f32 %v974, %v992
    %vm995 = vcmask 1040384
    %v996 = vsel %vm995, %v267, %v370
    %vm997 = vcmask 1041408
    %v998 = vsel %vm997, %v996, %v474
    %vm999 = vcmask 1042432
    %v1000 = vsel %vm999, %v998, %v578
    %vm1001 = vcmask 1043456
    %v1002 = vsel %vm1001, %v1000, %v682
    %vm1003 = vcmask 1044480
    %v1004 = vsel %vm1003, %v1002, %v786
    %vm1005 = vcmask 1045504
    %v1006 = vsel %vm1005, %v1004, %v890
    %vm1007 = vcmask 1046528
    %v1008 = vsel %vm1007, %v1006, %v994
    %v1009 = vmax.f32 %v1008, 0.0
    %v1010 = vld [vmem:[#allocation8] sm:$0xff]
    %v1011 = vld [vmem:[#allocation8 + $0x8] sm:$0xff]
    %v1012 = vld [vmem:[#allocation8 + $0x10] sm:$0xff]
    %v1013 = vld [vmem:[#allocation8 + $0x18] sm:$0xff]
    %v1014 = vld [vmem:[%s5] sm:$0x1]
    %v1016 = vlaneseq
    %v1017 = vshrl.u32 %v1016, 7
    %v1018 = vsub.s32 0, %v1017
    %v1019 = vrot.slane %v1014, %v1018
    %1022 = vrot.lane.b32.xlu0 %v1009, 32
    %v1023 = vpop.permute.xlu0 %1022
    %v1024 = vsel %vm172, %v1023, 0
    %1026 = vmatprep.subr.mxu0 0.0
    %1027 = vmatpush1.msra.mxu0 %v1010
    %1028 = vmatprep.subr.mxu0 0.0
    %1029 = vmatpush1.msra.mxu0 %v1011
    %1030 = vmatprep.subr.mxu0 0.0
    %1031 = vmatpush1.msra.mxu0 %v1012
    %1032 = vmatprep.subr.mxu0 0.0
    %1033 = vmatpush1.msra.mxu0 %v1013
    %1034 = vmatprep.subr.mxu0 0.0
    %1035 = vmatpush1.msra.mxu0 0.0
    %1036 = vmatprep.subr.mxu0 0.0
    %1037 = vmatpush1.msra.mxu0 0.0
    %1038 = vmatprep.subr.mxu0 0.0
    %1039 = vmatpush1.msra.mxu0 0.0
    %1040 = vmatprep.subr.mxu0 0.0
    %1041 = vmatpush1.msra.mxu0 0.0
    %1042 = vmatprep.subr.mxu0 0.0
    %1043 = vmatpush1.msra.mxu0 0.0
    %1044 = vmatprep.subr.mxu0 0.0
    %1045 = vmatpush1.msra.mxu0 0.0
    %1046 = vmatprep.subr.mxu0 0.0
    %1047 = vmatpush1.msra.mxu0 0.0
    %1048 = vmatprep.subr.mxu0 0.0
    %1049 = vmatpush1.msra.mxu0 0.0
    %1050 = vmatprep.subr.mxu0 0.0
    %1051 = vmatpush1.msra.mxu0 0.0
    %1052 = vmatprep.subr.mxu0 0.0
    %1053 = vmatpush1.msra.mxu0 0.0
    %1054 = vmatprep.subr.mxu0 0.0
    %1055 = vmatpush1.msra.mxu0 0.0
    %1056 = vmatprep.subr.mxu0 0.0
    %1057 = vmatpush1.msra.mxu0 0.0
    %1058 = vmatprep.subr.mxu0 0.0
    %1059 = vmatpush1.msra.mxu0 0.0
    %1060 = vmatprep.subr.mxu0 0.0
    %1061 = vmatpush1.msra.mxu0 0.0
    %1062 = vmatprep.subr.mxu0 0.0
    %1063 = vmatpush1.msra.mxu0 0.0
    %1064 = vmatprep.subr.mxu0 0.0
    %1065 = vmatpush1.msra.mxu0 0.0
    %1066 = vmatprep.subr.mxu0 0.0
    %1067 = vmatpush1.msra.mxu0 0.0
    %1068 = vmatprep.subr.mxu0 0.0
    %1069 = vmatpush1.msra.mxu0 0.0
    %1070 = vmatprep.subr.mxu0 0.0
    %1071 = vmatpush1.msra.mxu0 0.0
    %1072 = vmatprep.subr.mxu0 0.0
    %1073 = vmatpush1.msra.mxu0 0.0
    %1074 = vmatprep.subr.mxu0 0.0
    %1075 = vmatpush1.msra.mxu0 0.0
    %1076 = vmatprep.subr.mxu0 0.0
    %1077 = vmatpush1.msra.mxu0 0.0
    %1078 = vmatprep.subr.mxu0 0.0
    %1079 = vmatpush1.msra.mxu0 0.0
    %1080 = vmatprep.subr.mxu0 0.0
    %1081 = vmatpush1.msra.mxu0 0.0
    %1082 = vmatprep.subr.mxu0 0.0
    %1083 = vmatpush1.msra.mxu0 0.0
    %1084 = vmatprep.subr.mxu0 0.0
    %1085 = vmatpush1.msra.mxu0 0.0
    %1086 = vmatprep.subr.mxu0 0.0
    %1087 = vmatpush1.msra.mxu0 0.0
    %1088 = vmatprep.subr.mxu0 0.0
    %1089 = vmatpush1.msra.mxu0 0.0
    %1090 = vmatprep.mubr.f32.mxu0 0.0
    %1091 = vmatmul.mubr.f32.gmra.mrb[0].mxu0 %v1024
    %v1092 = vpop.f32.mrb[0].mxu0
    %v1093 = vadd.f32 %v1019, %v1092
    %v1094 = vpop.f32.mrb[0].mxu0
    %1095 = vdwg.mxu0
    %v1096 = vmax.f32 %v1093, 0.0
    %1097 = vst [vmem:[#allocation10] sm:$0xff] %v1096
    // Predicated region
    $region42: #{state_lstm_forward.1} parent=1 // pred_check
      _
    $region43: #{state_lstm_forward.1} parent=1 // pred_check_branch
      %1099 = sbr.rel (0) target = $region45
    $region44: #{state_lstm_forward.1} parent=1 // pred_region
      %s1101 = ssub.s32 128, 128
      %1102 = vsyncadd [#allocation4], %s1101
      %s1104 = sshll.u32 [#allocation10], 4
      %s1105 = int_to_ptr.vmem [resolvable:$true] %s1104
      %1107 = dma.vmem_to_hbm [thread:$0]  %s1105, 128, %s6, [#allocation4]
    $region45: #{state_lstm_forward.1} parent=1 // pred_fallthru
      _
    // Predicated region
    $region46: #{state_lstm_forward.1} parent=1 // pred_check
      _
    $region47: #{state_lstm_forward.1} parent=1 // pred_check_branch
      %1109 = sbr.rel (0) target = $region49
    $region48: #{state_lstm_forward.1} parent=1 // pred_region
      %1110 = dma.done [#allocation4], 128
    $region49: #{state_lstm_forward.1} parent=1 // pred_fallthru
      _
    %1111 = vsyncpa [#allocation3], 1
    %1112 = vsyncpa [#allocation6], 1
    %1113 = vsyncpa [#allocation9], 1
    %1114 = vsyncpa [#allocation4], 1

</llo_original>
